<compile_context>
chip_gen: v7x
topology: tpu7x:2x2x1
jax: 0.10.0
libtpu: 0.0.40
codegen_flags: <defaults>
</compile_context>

<pallas_src>
import functools

import jax
import jax.numpy as jnp
from jax.experimental import pallas as pl
from jax.experimental.pallas import tpu as pltpu


def _soh_kernel(x_ref, w1_ref, b1_ref, w2_ref, b2_ref, w3_ref, b3_ref, out_ref):
    """Fused MLP on one batch tile.

    x_ref  : (Bt, I)  f32
    w1_ref : (I, 8)   f32   (= linear1.weight.T)
    b1_ref : (1, 8)   f32
    w2_ref : (8, 8)   f32   (= linear2.weight.T)
    b2_ref : (1, 8)   f32
    w3_ref : (8, 1)   f32   (= linear3.weight.T)
    b3_ref : (1, 1)   f32
    out_ref: (Bt, 1)  f32
    """
    x = x_ref[...]
    h1 = jnp.dot(x, w1_ref[...], preferred_element_type=jnp.float32) + b1_ref[...]
    h1 = jnp.maximum(h1, 0.0)
    h2 = jnp.dot(h1, w2_ref[...], preferred_element_type=jnp.float32) + b2_ref[...]
    h2 = jnp.maximum(h2, 0.0)
    y = jnp.dot(h2, w3_ref[...], preferred_element_type=jnp.float32) + b3_ref[...]
    out_ref[...] = y.astype(out_ref.dtype)  # single store per tile


def soh_model_forward(x, params, *, max_block_b=512):
    """x: (..., input_size) float32. Returns (..., 1), matching nn.Linear broadcasting."""
    w1, b1 = params["w1"], params["b1"]
    w2, b2 = params["w2"], params["b2"]
    w3, b3 = params["w3"], params["b3"]

    lead_shape = x.shape[:-1]
    I = x.shape[-1]
    x2d = x.reshape((-1, I)).astype(jnp.float32)           # (B, I)
    B = x2d.shape[0]

    # Pad batch rows to a sublane-friendly multiple of 8 and tile it.
    padded_b = max(8, ((B + 7) // 8) * 8)
    block_b = min(max_block_b, padded_b)
    padded_b = ((padded_b + block_b - 1) // block_b) * block_b
    if padded_b != B:
        x2d = jnp.pad(x2d, ((0, padded_b - B), (0, 0)))
    grid = (padded_b // block_b,)

    H1 = w1.shape[0]          # 8
    H2 = w2.shape[0]          # 8
    O = w3.shape[0]           # 1

    w1t = w1.T.astype(jnp.float32)                         # (I, 8)
    w2t = w2.T.astype(jnp.float32)                         # (8, 8)
    w3t = w3.T.astype(jnp.float32)                         # (8, 1)
    b1r = b1.reshape(1, H1).astype(jnp.float32)
    b2r = b2.reshape(1, H2).astype(jnp.float32)
    b3r = b3.reshape(1, O).astype(jnp.float32)

    # Batch is blocked; weights/biases use full-array blocks (VMEM-resident).
    full = lambda shape: pl.BlockSpec(shape, lambda i: (0, 0))
    out2d = pl.pallas_call(
        _soh_kernel,
        out_shape=jax.ShapeDtypeStruct((padded_b, O), jnp.float32),
        grid=grid,
        in_specs=[
            pl.BlockSpec((block_b, I), lambda i: (i, 0)),  # x tile
            full((I, H1)), full((1, H1)),
            full((H1, H2)), full((1, H2)),
            full((H2, O)), full((1, O)),
        ],
        out_specs=pl.BlockSpec((block_b, O), lambda i: (i, 0)),
        compiler_params=pltpu.CompilerParams(
            dimension_semantics=("parallel",)),            # megacore on v7x
    )(x2d, w1t, b1r, w2t, b2r, w3t, b3r)

    return out2d[:B].reshape(lead_shape + (O,))


def _reference_forward(x, params):
    """Pure-JAX reference mirroring the PyTorch SOHModel forward."""
    h = jnp.maximum(x @ params["w1"].T + params["b1"], 0.0)
    h = jnp.maximum(h @ params["w2"].T + params["b2"], 0.0)
    return h @ params["w3"].T + params["b3"]


def init_params(key, input_size):
    def linear(k, fan_in, fan_out):
        kw, kb = jax.random.split(k)
        scale = 1.0 / jnp.sqrt(fan_in)
        w = jax.random.uniform(kw, (fan_out, fan_in), jnp.float32, -scale, scale)
        b = jax.random.uniform(kb, (fan_out,), jnp.float32, -scale, scale)
        return w, b

    k1, k2, k3 = jax.random.split(key, 3)
    w1, b1 = linear(k1, input_size, 8)
    w2, b2 = linear(k2, 8, 8)
    w3, b3 = linear(k3, 8, 1)
    return {"w1": w1, "b1": b1, "w2": w2, "b2": b2, "w3": w3, "b3": b3}


if __name__ == "__main__":
    B, input_size = 2, 4

    key = jax.random.PRNGKey(0)
    kx, kp = jax.random.split(key)
    x = jax.random.normal(kx, (B, input_size), jnp.float32)
    params = init_params(kp, input_size)

    out = jax.block_until_ready(soh_model_forward(x, params))
    ref = jax.block_until_ready(_reference_forward(x, params))

    assert out.shape == (B, 1), out.shape
    assert jnp.allclose(out, ref, atol=1e-5, rtol=1e-5), "mismatch vs reference"
    print("KERNEL_OK")
</pallas_src>

<mosaic_0001>
module attributes {stable_mosaic.version = 11 : i64} {
  func.func @_soh_kernel(%arg0: i32, %arg1: memref<8x4xf32, #tpu.memory_space<vmem>>, %arg2: memref<4x8xf32, #tpu.memory_space<vmem>>, %arg3: memref<1x8xf32, #tpu.memory_space<vmem>>, %arg4: memref<8x8xf32, #tpu.memory_space<vmem>>, %arg5: memref<1x8xf32, #tpu.memory_space<vmem>>, %arg6: memref<8x1xf32, #tpu.memory_space<vmem>>, %arg7: memref<1x1xf32, #tpu.memory_space<vmem>>, %arg8: memref<8x1xf32, #tpu.memory_space<vmem>>) attributes {dimension_semantics = [#tpu.dimension_semantics<parallel>], iteration_bounds = array<i64: 1>, scalar_prefetch = 0 : i64, scratch_operands = 0 : i64, tpu.core_type = #tpu.core_type<tc>, window_params = [{transform_indices = @transform_0, window_bounds = array<i64: 8, 4>}, {pipeline_mode = #tpu.pipeline_mode<synchronous>, transform_indices = @transform_1, window_bounds = array<i64: 4, 8>}, {pipeline_mode = #tpu.pipeline_mode<synchronous>, transform_indices = @transform_2, window_bounds = array<i64: 1, 8>}, {pipeline_mode = #tpu.pipeline_mode<synchronous>, transform_indices = @transform_3, window_bounds = array<i64: 8, 8>}, {pipeline_mode = #tpu.pipeline_mode<synchronous>, transform_indices = @transform_4, window_bounds = array<i64: 1, 8>}, {pipeline_mode = #tpu.pipeline_mode<synchronous>, transform_indices = @transform_5, window_bounds = array<i64: 8, 1>}, {pipeline_mode = #tpu.pipeline_mode<synchronous>, transform_indices = @transform_6, window_bounds = array<i64: 1, 1>}, {transform_indices = @transform_7, window_bounds = array<i64: 8, 1>}]} {
    %c0 = arith.constant 0 : index
    %c0_0 = arith.constant 0 : index
    %0 = vector.load %arg1[%c0, %c0_0] : memref<8x4xf32, #tpu.memory_space<vmem>>, vector<8x4xf32>
    %c0_1 = arith.constant 0 : index
    %c0_2 = arith.constant 0 : index
    %1 = vector.load %arg2[%c0_1, %c0_2] : memref<4x8xf32, #tpu.memory_space<vmem>>, vector<4x8xf32>
    %cst = arith.constant dense<0.000000e+00> : vector<8x8xf32>
    %2 = tpu.matmul %0, %1, %cst {dimension_numbers = #tpu.dot_dimension_numbers<[1], [0], [0], [1], [0, 0, 1, 1], [], []>} : vector<8x4xf32>, vector<4x8xf32>, vector<8x8xf32> -> vector<8x8xf32>
    %c0_3 = arith.constant 0 : index
    %c0_4 = arith.constant 0 : index
    %3 = vector.load %arg3[%c0_3, %c0_4] : memref<1x8xf32, #tpu.memory_space<vmem>>, vector<1x8xf32>
    %4 = vector.broadcast %3 : vector<1x8xf32> to vector<8x8xf32>
    %5 = arith.addf %2, %4 : vector<8x8xf32>
    %cst_5 = arith.constant 0.000000e+00 : f32
    %6 = vector.broadcast %cst_5 : f32 to vector<8x8xf32>
    %7 = arith.maximumf %5, %6 : vector<8x8xf32>
    %c0_6 = arith.constant 0 : index
    %c0_7 = arith.constant 0 : index
    %8 = vector.load %arg4[%c0_6, %c0_7] : memref<8x8xf32, #tpu.memory_space<vmem>>, vector<8x8xf32>
    %cst_8 = arith.constant dense<0.000000e+00> : vector<8x8xf32>
    %9 = tpu.matmul %7, %8, %cst_8 {dimension_numbers = #tpu.dot_dimension_numbers<[1], [0], [0], [1], [0, 0, 1, 1], [], []>} : vector<8x8xf32>, vector<8x8xf32>, vector<8x8xf32> -> vector<8x8xf32>
    %c0_9 = arith.constant 0 : index
    %c0_10 = arith.constant 0 : index
    %10 = vector.load %arg5[%c0_9, %c0_10] : memref<1x8xf32, #tpu.memory_space<vmem>>, vector<1x8xf32>
    %11 = vector.broadcast %10 : vector<1x8xf32> to vector<8x8xf32>
    %12 = arith.addf %9, %11 : vector<8x8xf32>
    %cst_11 = arith.constant 0.000000e+00 : f32
    %13 = vector.broadcast %cst_11 : f32 to vector<8x8xf32>
    %14 = arith.maximumf %12, %13 : vector<8x8xf32>
    %c0_12 = arith.constant 0 : index
    %c0_13 = arith.constant 0 : index
    %15 = vector.load %arg6[%c0_12, %c0_13] : memref<8x1xf32, #tpu.memory_space<vmem>>, vector<8x1xf32>
    %cst_14 = arith.constant dense<0.000000e+00> : vector<8x1xf32>
    %16 = tpu.matmul %14, %15, %cst_14 {dimension_numbers = #tpu.dot_dimension_numbers<[1], [0], [0], [1], [0, 0, 1, 1], [], []>} : vector<8x8xf32>, vector<8x1xf32>, vector<8x1xf32> -> vector<8x1xf32>
    %c0_15 = arith.constant 0 : index
    %c0_16 = arith.constant 0 : index
    %17 = vector.load %arg7[%c0_15, %c0_16] : memref<1x1xf32, #tpu.memory_space<vmem>>, vector<1x1xf32>
    %18 = vector.broadcast %17 : vector<1x1xf32> to vector<8x1xf32>
    %19 = arith.addf %16, %18 : vector<8x1xf32>
    %c0_17 = arith.constant 0 : index
    %c0_18 = arith.constant 0 : index
    %20 = vector.load %arg8[%c0_17, %c0_18] : memref<8x1xf32, #tpu.memory_space<vmem>>, vector<8x1xf32>
    tpu.vector_store %arg8[%c0_17, %c0_18], %19 {strides = array<i32>} : memref<8x1xf32, #tpu.memory_space<vmem>>, vector<8x1xf32>,
    return
  }
  func.func @transform_0(%arg0: i32) -> (i32, i32) {
    %c0_i32 = arith.constant 0 : i32
    %c0_i32_0 = arith.constant 0 : i32
    return %arg0, %c0_i32 : i32, i32
  }
  func.func @transform_1(%arg0: i32) -> (i32, i32) {
    %c0_i32 = arith.constant 0 : i32
    %c0_i32_0 = arith.constant 0 : i32
    %c0_i32_1 = arith.constant 0 : i32
    return %c0_i32, %c0_i32_0 : i32, i32
  }
  func.func @transform_2(%arg0: i32) -> (i32, i32) {
    %c0_i32 = arith.constant 0 : i32
    %c0_i32_0 = arith.constant 0 : i32
    %c0_i32_1 = arith.constant 0 : i32
    return %c0_i32, %c0_i32_0 : i32, i32
  }
  func.func @transform_3(%arg0: i32) -> (i32, i32) {
    %c0_i32 = arith.constant 0 : i32
    %c0_i32_0 = arith.constant 0 : i32
    %c0_i32_1 = arith.constant 0 : i32
    return %c0_i32, %c0_i32_0 : i32, i32
  }
  func.func @transform_4(%arg0: i32) -> (i32, i32) {
    %c0_i32 = arith.constant 0 : i32
    %c0_i32_0 = arith.constant 0 : i32
    %c0_i32_1 = arith.constant 0 : i32
    return %c0_i32, %c0_i32_0 : i32, i32
  }
  func.func @transform_5(%arg0: i32) -> (i32, i32) {
    %c0_i32 = arith.constant 0 : i32
    %c0_i32_0 = arith.constant 0 : i32
    %c0_i32_1 = arith.constant 0 : i32
    return %c0_i32, %c0_i32_0 : i32, i32
  }
  func.func @transform_6(%arg0: i32) -> (i32, i32) {
    %c0_i32 = arith.constant 0 : i32
    %c0_i32_0 = arith.constant 0 : i32
    %c0_i32_1 = arith.constant 0 : i32
    return %c0_i32, %c0_i32_0 : i32, i32
  }
  func.func @transform_7(%arg0: i32) -> (i32, i32) {
    %c0_i32 = arith.constant 0 : i32
    %c0_i32_0 = arith.constant 0 : i32
    return %arg0, %c0_i32 : i32, i32
  }
}

</mosaic_0001>

<llo_original>
// kernel: tpu_custom_call.1
$region0: #{tpu_custom_call.1}
  #allocation0 [shape = 'u32[]', space=smem, size = 0x4, offset = 0x4, fixed_abs, tag = 'smem constant byte address 0x4 - core index']
  #allocation1 [shape = 'u32[144,128]{1,0:T(1,128)}', space=vmem, size = 0x12000, scoped, tag = 'internal scratch']
  #allocation2 [shape = 'f32[1,1]{1,0:T(1,128)S(1)}', space=vmem, size = 0x200, scoped, tag = 'scoped memory for tpu_custom_call.1']
  %s0 = inlined_call_operand.vmem [shape: f32[8,4], index: 0, kind: input, shape index: {}]
  %s1 = inlined_call_operand.vmem [shape: f32[4,8], index: 1, kind: input, shape index: {}]
  %s2 = inlined_call_operand.vmem [shape: f32[1,8], index: 2, kind: input, shape index: {}]
  %s3 = inlined_call_operand.vmem [shape: f32[8,8], index: 3, kind: input, shape index: {}]
  %s4 = inlined_call_operand.vmem [shape: f32[1,8], index: 4, kind: input, shape index: {}]
  %s5 = inlined_call_operand.vmem [shape: f32[8,1], index: 5, kind: input, shape index: {}]
  %s6 = inlined_call_operand.<no memory space> [shape: f32[1,1], index: 6, kind: input, shape index: {}]
  %s7 = inlined_call_operand.vmem [shape: f32[8,1], index: 7, kind: output, shape index: {}]
  %s8 = sld [smem:[#allocation0]]
  $region38: #{tpu_custom_call.1} parent=0
    _
  %s10 = ssub.s32 1, %s8
  %s11 = scalar_select 0, %s10, %s8
  %v12 = vstv %s6
  %13 = vst [vmem:[#allocation2] sm:$0x1] %v12
  // Predicated region
  $region2: #{tpu_custom_call.1} parent=0 // pred_check
    _
  $region3: #{tpu_custom_call.1} parent=0 // pred_check_branch
    %15 = sbr.rel (0) target = $region5
  $region4: #{tpu_custom_call.1} parent=0 // pred_region
    _
  $region5: #{tpu_custom_call.1} parent=0 // pred_fallthru
    _
  // Predicated region
  $region6: #{tpu_custom_call.1} parent=0 // pred_check
    _
  $region7: #{tpu_custom_call.1} parent=0 // pred_check_branch
    %17 = sbr.rel (0) target = $region9
  $region8: #{tpu_custom_call.1} parent=0 // pred_region
    _
  $region9: #{tpu_custom_call.1} parent=0 // pred_fallthru
    _
  // Predicated region
  $region10: #{tpu_custom_call.1} parent=0 // pred_check
    _
  $region11: #{tpu_custom_call.1} parent=0 // pred_check_branch
    %19 = sbr.rel (0) target = $region13
  $region12: #{tpu_custom_call.1} parent=0 // pred_region
    _
  $region13: #{tpu_custom_call.1} parent=0 // pred_fallthru
    _
  // Predicated region
  $region14: #{tpu_custom_call.1} parent=0 // pred_check
    _
  $region15: #{tpu_custom_call.1} parent=0 // pred_check_branch
    %21 = sbr.rel (0) target = $region17
  $region16: #{tpu_custom_call.1} parent=0 // pred_region
    _
  $region17: #{tpu_custom_call.1} parent=0 // pred_fallthru
    _
  // Predicated region
  $region18: #{tpu_custom_call.1} parent=0 // pred_check
    _
  $region19: #{tpu_custom_call.1} parent=0 // pred_check_branch
    %23 = sbr.rel (0) target = $region21
  $region20: #{tpu_custom_call.1} parent=0 // pred_region
    _
  $region21: #{tpu_custom_call.1} parent=0 // pred_fallthru
    _
  // Predicated region
  $region22: #{tpu_custom_call.1} parent=0 // pred_check
    _
  $region23: #{tpu_custom_call.1} parent=0 // pred_check_branch
    %25 = sbr.rel (0) target = $region25
  $region24: #{tpu_custom_call.1} parent=0 // pred_region
    _
  $region25: #{tpu_custom_call.1} parent=0 // pred_fallthru
    _
  // Predicated region
  $region26: #{tpu_custom_call.1} parent=0 // pred_check
    _
  $region27: #{tpu_custom_call.1} parent=0 // pred_check_branch
    %27 = sbr.rel (0) target = $region29
  $region28: #{tpu_custom_call.1} parent=0 // pred_region
    _
  $region29: #{tpu_custom_call.1} parent=0 // pred_fallthru
    _
  %v28 = vld [vmem:[%s0] sm:$0xff]
  %v29 = vld [vmem:[%s1] sm:$0xf]
  %v30 = vld [vmem:[%s2] sm:$0x1]
  %v32 = vlaneseq
  %v33 = vshrl.u32 %v32, 7
  %v34 = vsub.s32 0, %v33
  %v35 = vrot.slane %v30, %v34
  %vm37 = vcmask 31744
  %v39 = vsel %vm37, %v28, 0
  %vm41 = vcmask 1043456
  %v43 = vsel %vm41, %v29, 0
  %45 = vmatprep.subr.mxu0 0.0
  %46 = vmatpush1.msra.mxu0 %v43
  %47 = vmatprep.subr.mxu0 0.0
  %48 = vmatpush1.msra.mxu0 0.0
  %49 = vmatprep.subr.mxu0 0.0
  %50 = vmatpush1.msra.mxu0 0.0
  %51 = vmatprep.subr.mxu0 0.0
  %52 = vmatpush1.msra.mxu0 0.0
  %53 = vmatprep.subr.mxu0 0.0
  %54 = vmatpush1.msra.mxu0 0.0
  %55 = vmatprep.subr.mxu0 0.0
  %56 = vmatpush1.msra.mxu0 0.0
  %57 = vmatprep.subr.mxu0 0.0
  %58 = vmatpush1.msra.mxu0 0.0
  %59 = vmatprep.subr.mxu0 0.0
  %60 = vmatpush1.msra.mxu0 0.0
  %61 = vmatprep.subr.mxu0 0.0
  %62 = vmatpush1.msra.mxu0 0.0
  %63 = vmatprep.subr.mxu0 0.0
  %64 = vmatpush1.msra.mxu0 0.0
  %65 = vmatprep.subr.mxu0 0.0
  %66 = vmatpush1.msra.mxu0 0.0
  %67 = vmatprep.subr.mxu0 0.0
  %68 = vmatpush1.msra.mxu0 0.0
  %69 = vmatprep.subr.mxu0 0.0
  %70 = vmatpush1.msra.mxu0 0.0
  %71 = vmatprep.subr.mxu0 0.0
  %72 = vmatpush1.msra.mxu0 0.0
  %73 = vmatprep.subr.mxu0 0.0
  %74 = vmatpush1.msra.mxu0 0.0
  %75 = vmatprep.subr.mxu0 0.0
  %76 = vmatpush1.msra.mxu0 0.0
  %77 = vmatprep.subr.mxu0 0.0
  %78 = vmatpush1.msra.mxu0 0.0
  %79 = vmatprep.subr.mxu0 0.0
  %80 = vmatpush1.msra.mxu0 0.0
  %81 = vmatprep.subr.mxu0 0.0
  %82 = vmatpush1.msra.mxu0 0.0
  %83 = vmatprep.subr.mxu0 0.0
  %84 = vmatpush1.msra.mxu0 0.0
  %85 = vmatprep.subr.mxu0 0.0
  %86 = vmatpush1.msra.mxu0 0.0
  %87 = vmatprep.subr.mxu0 0.0
  %88 = vmatpush1.msra.mxu0 0.0
  %89 = vmatprep.subr.mxu0 0.0
  %90 = vmatpush1.msra.mxu0 0.0
  %91 = vmatprep.subr.mxu0 0.0
  %92 = vmatpush1.msra.mxu0 0.0
  %93 = vmatprep.subr.mxu0 0.0
  %94 = vmatpush1.msra.mxu0 0.0
  %95 = vmatprep.subr.mxu0 0.0
  %96 = vmatpush1.msra.mxu0 0.0
  %97 = vmatprep.subr.mxu0 0.0
  %98 = vmatpush1.msra.mxu0 0.0
  %99 = vmatprep.subr.mxu0 0.0
  %100 = vmatpush1.msra.mxu0 0.0
  %101 = vmatprep.subr.mxu0 0.0
  %102 = vmatpush1.msra.mxu0 0.0
  %103 = vmatprep.subr.mxu0 0.0
  %104 = vmatpush1.msra.mxu0 0.0
  %105 = vmatprep.subr.mxu0 0.0
  %106 = vmatpush1.msra.mxu0 0.0
  %107 = vmatprep.subr.mxu0 0.0
  %108 = vmatpush1.msra.mxu0 0.0
  %109 = vmatprep.mubr.f32.mxu0 0.0
  %110 = vmatmul.mubr.f32.gmra.mrb[0].mxu0 %v39
  %v111 = vpop.f32.mrb[0].mxu0
  %v112 = vadd.f32 %v35, %v111
  %v113 = vpop.f32.mrb[0].mxu0
  %114 = vdwg.mxu0
  %v115 = vmax.f32 %v112, 0.0
  %v116 = vld [vmem:[%s3] sm:$0xff]
  %v117 = vld [vmem:[%s4] sm:$0x1]
  %v119 = vlaneseq
  %v120 = vshrl.u32 %v119, 7
  %v121 = vsub.s32 0, %v120
  %v122 = vrot.slane %v117, %v121
  %vm124 = vcmask 64512
  %v126 = vsel %vm124, %v115, 0
  %128 = vmatprep.subr.mxu0 0.0
  %129 = vmatpush1.msra.mxu0 %v116
  %130 = vmatprep.subr.mxu0 0.0
  %131 = vmatpush1.msra.mxu0 0.0
  %132 = vmatprep.subr.mxu0 0.0
  %133 = vmatpush1.msra.mxu0 0.0
  %134 = vmatprep.subr.mxu0 0.0
  %135 = vmatpush1.msra.mxu0 0.0
  %136 = vmatprep.subr.mxu0 0.0
  %137 = vmatpush1.msra.mxu0 0.0
  %138 = vmatprep.subr.mxu0 0.0
  %139 = vmatpush1.msra.mxu0 0.0
  %140 = vmatprep.subr.mxu0 0.0
  %141 = vmatpush1.msra.mxu0 0.0
  %142 = vmatprep.subr.mxu0 0.0
  %143 = vmatpush1.msra.mxu0 0.0
  %144 = vmatprep.subr.mxu0 0.0
  %145 = vmatpush1.msra.mxu0 0.0
  %146 = vmatprep.subr.mxu0 0.0
  %147 = vmatpush1.msra.mxu0 0.0
  %148 = vmatprep.subr.mxu0 0.0
  %149 = vmatpush1.msra.mxu0 0.0
  %150 = vmatprep.subr.mxu0 0.0
  %151 = vmatpush1.msra.mxu0 0.0
  %152 = vmatprep.subr.mxu0 0.0
  %153 = vmatpush1.msra.mxu0 0.0
  %154 = vmatprep.subr.mxu0 0.0
  %155 = vmatpush1.msra.mxu0 0.0
  %156 = vmatprep.subr.mxu0 0.0
  %157 = vmatpush1.msra.mxu0 0.0
  %158 = vmatprep.subr.mxu0 0.0
  %159 = vmatpush1.msra.mxu0 0.0
  %160 = vmatprep.subr.mxu0 0.0
  %161 = vmatpush1.msra.mxu0 0.0
  %162 = vmatprep.subr.mxu0 0.0
  %163 = vmatpush1.msra.mxu0 0.0
  %164 = vmatprep.subr.mxu0 0.0
  %165 = vmatpush1.msra.mxu0 0.0
  %166 = vmatprep.subr.mxu0 0.0
  %167 = vmatpush1.msra.mxu0 0.0
  %168 = vmatprep.subr.mxu0 0.0
  %169 = vmatpush1.msra.mxu0 0.0
  %170 = vmatprep.subr.mxu0 0.0
  %171 = vmatpush1.msra.mxu0 0.0
  %172 = vmatprep.subr.mxu0 0.0
  %173 = vmatpush1.msra.mxu0 0.0
  %174 = vmatprep.subr.mxu0 0.0
  %175 = vmatpush1.msra.mxu0 0.0
  %176 = vmatprep.subr.mxu0 0.0
  %177 = vmatpush1.msra.mxu0 0.0
  %178 = vmatprep.subr.mxu0 0.0
  %179 = vmatpush1.msra.mxu0 0.0
  %180 = vmatprep.subr.mxu0 0.0
  %181 = vmatpush1.msra.mxu0 0.0
  %182 = vmatprep.subr.mxu0 0.0
  %183 = vmatpush1.msra.mxu0 0.0
  %184 = vmatprep.subr.mxu0 0.0
  %185 = vmatpush1.msra.mxu0 0.0
  %186 = vmatprep.subr.mxu0 0.0
  %187 = vmatpush1.msra.mxu0 0.0
  %188 = vmatprep.subr.mxu0 0.0
  %189 = vmatpush1.msra.mxu0 0.0
  %190 = vmatprep.subr.mxu0 0.0
  %191 = vmatpush1.msra.mxu0 0.0
  %192 = vmatprep.mubr.f32.mxu0 0.0
  %193 = vmatmul.mubr.f32.gmra.mrb[0].mxu0 %v126
  %v194 = vpop.f32.mrb[0].mxu0
  %v195 = vadd.f32 %v122, %v194
  %v196 = vpop.f32.mrb[0].mxu0
  %197 = vdwg.mxu0
  %v198 = vmax.f32 %v195, 0.0
  %v199 = vld [vmem:[%s5] sm:$0xff]
  %v200 = vld [vmem:[#allocation2] sm:$0x1]
  %v202 = vlaneseq
  %v203 = vshrl.u32 %v202, 7
  %v204 = vsub.s32 0, %v203
  %v205 = vrot.slane %v200, %v204
  %v208 = vsel %vm124, %v198, 0
  %210 = vmatprep.subr.mxu0 0.0
  %211 = vmatpush1.msra.mxu0 %v199
  %212 = vmatprep.subr.mxu0 0.0
  %213 = vmatpush1.msra.mxu0 0.0
  %214 = vmatprep.subr.mxu0 0.0
  %215 = vmatpush1.msra.mxu0 0.0
  %216 = vmatprep.subr.mxu0 0.0
  %217 = vmatpush1.msra.mxu0 0.0
  %218 = vmatprep.subr.mxu0 0.0
  %219 = vmatpush1.msra.mxu0 0.0
  %220 = vmatprep.subr.mxu0 0.0
  %221 = vmatpush1.msra.mxu0 0.0
  %222 = vmatprep.subr.mxu0 0.0
  %223 = vmatpush1.msra.mxu0 0.0
  %224 = vmatprep.subr.mxu0 0.0
  %225 = vmatpush1.msra.mxu0 0.0
  %226 = vmatprep.subr.mxu0 0.0
  %227 = vmatpush1.msra.mxu0 0.0
  %228 = vmatprep.subr.mxu0 0.0
  %229 = vmatpush1.msra.mxu0 0.0
  %230 = vmatprep.subr.mxu0 0.0
  %231 = vmatpush1.msra.mxu0 0.0
  %232 = vmatprep.subr.mxu0 0.0
  %233 = vmatpush1.msra.mxu0 0.0
  %234 = vmatprep.subr.mxu0 0.0
  %235 = vmatpush1.msra.mxu0 0.0
  %236 = vmatprep.subr.mxu0 0.0
  %237 = vmatpush1.msra.mxu0 0.0
  %238 = vmatprep.subr.mxu0 0.0
  %239 = vmatpush1.msra.mxu0 0.0
  %240 = vmatprep.subr.mxu0 0.0
  %241 = vmatpush1.msra.mxu0 0.0
  %242 = vmatprep.subr.mxu0 0.0
  %243 = vmatpush1.msra.mxu0 0.0
  %244 = vmatprep.subr.mxu0 0.0
  %245 = vmatpush1.msra.mxu0 0.0
  %246 = vmatprep.subr.mxu0 0.0
  %247 = vmatpush1.msra.mxu0 0.0
  %248 = vmatprep.subr.mxu0 0.0
  %249 = vmatpush1.msra.mxu0 0.0
  %250 = vmatprep.subr.mxu0 0.0
  %251 = vmatpush1.msra.mxu0 0.0
  %252 = vmatprep.subr.mxu0 0.0
  %253 = vmatpush1.msra.mxu0 0.0
  %254 = vmatprep.subr.mxu0 0.0
  %255 = vmatpush1.msra.mxu0 0.0
  %256 = vmatprep.subr.mxu0 0.0
  %257 = vmatpush1.msra.mxu0 0.0
  %258 = vmatprep.subr.mxu0 0.0
  %259 = vmatpush1.msra.mxu0 0.0
  %260 = vmatprep.subr.mxu0 0.0
  %261 = vmatpush1.msra.mxu0 0.0
  %262 = vmatprep.subr.mxu0 0.0
  %263 = vmatpush1.msra.mxu0 0.0
  %264 = vmatprep.subr.mxu0 0.0
  %265 = vmatpush1.msra.mxu0 0.0
  %266 = vmatprep.subr.mxu0 0.0
  %267 = vmatpush1.msra.mxu0 0.0
  %268 = vmatprep.subr.mxu0 0.0
  %269 = vmatpush1.msra.mxu0 0.0
  %270 = vmatprep.subr.mxu0 0.0
  %271 = vmatpush1.msra.mxu0 0.0
  %272 = vmatprep.subr.mxu0 0.0
  %273 = vmatpush1.msra.mxu0 0.0
  %274 = vmatprep.mubr.f32.mxu0 0.0
  %275 = vmatmul.mubr.f32.gmra.mrb[0].mxu0 %v208
  %v276 = vpop.f32.mrb[0].mxu0
  %v277 = vadd.f32 %v205, %v276
  %v278 = vpop.f32.mrb[0].mxu0
  %279 = vdwg.mxu0
  %vm280 = vcmask 7168
  %281 = vst.msk [vmem:[%s7] sm:$0xff] %vm280, %v277
  // Predicated region
  $region30: #{tpu_custom_call.1} parent=0 // pred_check
    _
  $region31: #{tpu_custom_call.1} parent=0 // pred_check_branch
    %283 = sbr.rel (0) target = $region33
  $region32: #{tpu_custom_call.1} parent=0 // pred_region
    _
  $region33: #{tpu_custom_call.1} parent=0 // pred_fallthru
    _
  // Predicated region
  $region34: #{tpu_custom_call.1} parent=0 // pred_check
    _
  $region35: #{tpu_custom_call.1} parent=0 // pred_check_branch
    %285 = sbr.rel (0) target = $region37
  $region36: #{tpu_custom_call.1} parent=0 // pred_region
    _
  $region37: #{tpu_custom_call.1} parent=0 // pred_fallthru
    _

</llo_original>
